<compile_context>
chip_gen: v5e
topology: v5e:2x2
jax: 0.10.0
libtpu: 0.0.40
codegen_flags: <defaults>
</compile_context>

<pallas_src>
import functools

import jax
import jax.numpy as jnp
from jax.experimental import pallas as pl
from jax.experimental.pallas import tpu as pltpu


def _round_up(x, m):
    return ((x + m - 1) // m) * m


def _monotonic_kernel(xT_ref, w_ref, t_ref, o_ref, *, K, h_K):
    """One batch tile.

    xT_ref: (n, TB)       input tile, batch on the lane axis
    w_ref : (K*h_K, n)    precomputed exp(z), grid-invariant (resident in VMEM)
    t_ref : (K*h_K, 1)    biases (f32), grid-invariant
    o_ref : (1, TB)       lane-dense output row
    """
    # Single fused MXU matmul for all K groups: (K*h_K, n) @ (n, TB) -> (K*h_K, TB).
    g = jnp.dot(w_ref[...], xT_ref[...], preferred_element_type=jnp.float32)
    g = g + t_ref[...]                                  # per-row bias, broadcast over lanes

    # Per-group max over the h_K neurons (sublane / XLU reduce), running min over
    # groups on the VPU.  K is small & static -> fully unrolled, static 8-aligned
    # sublane slices (h_K is a multiple of 8 here).
    y = None
    for k in range(K):
        gk = g[k * h_K:(k + 1) * h_K, :]                # (h_K, TB)
        gmax = jnp.max(gk, axis=0, keepdims=True)       # (1, TB)
        y = gmax if k == 0 else jnp.minimum(y, gmax)
    o_ref[...] = y.astype(o_ref.dtype)


def monotonic_nn_forward(x, z, t, *, block_b=1024, use_bf16=False):
    """x: (B, n) f32, z: (K, h_K, n) f32, t: (K, h_K) f32 -> y: (B,) f32."""
    B, n = x.shape
    K, h_K, _ = z.shape
    KH = K * h_K

    # --- one-time precompute (hoisted out of the kernel; constant wrt batch) ---
    W = jnp.exp(z.astype(jnp.float32)).reshape(KH, n)        # (K*h_K, n)
    t_col = t.astype(jnp.float32).reshape(KH, 1)             # (K*h_K, 1)

    # --- lane-dense layout: batch on the last (lane) axis ---
    xT = x.T                                                 # (n, B)

    TB = min(_round_up(block_b, 128), _round_up(B, 128))     # lane-aligned batch tile
    Bp = _round_up(B, TB)
    if Bp != B:
        # Zero padding is safe: padded columns produce finite garbage that is
        # sliced off below (never NaN/Inf propagation into real lanes).
        xT = jnp.pad(xT, ((0, 0), (0, Bp - B)))

    if use_bf16:                                             # halves HBM traffic (v6e/v7x)
        xT = xT.astype(jnp.bfloat16)
        W = W.astype(jnp.bfloat16)

    num_tiles = pl.cdiv(Bp, TB)

    out = pl.pallas_call(
        functools.partial(_monotonic_kernel, K=K, h_K=h_K),
        out_shape=jax.ShapeDtypeStruct((1, Bp), jnp.float32),
        grid=(num_tiles,),
        in_specs=[
            pl.BlockSpec((n, TB), lambda i: (0, i)),         # x tile, pipelined over batch
            pl.BlockSpec((KH, n), lambda i: (0, 0)),         # weights, grid-invariant
            pl.BlockSpec((KH, 1), lambda i: (0, 0)),         # biases, grid-invariant
        ],
        out_specs=pl.BlockSpec((1, TB), lambda i: (0, i)),
        compiler_params=pltpu.CompilerParams(
            dimension_semantics=("parallel",)),              # shard batch across TCs (v7x)
    )(xT, W, t_col)
    return out[0, :B]


def reference_forward(x, z, t):
    """Pure-JAX reference mirroring the PyTorch forward."""
    y = None
    for k in range(z.shape[0]):
        g = x @ jnp.exp(z[k]).T + t[k]
        gmax = jnp.max(g, axis=1)
        y = gmax if k == 0 else jnp.minimum(y, gmax)
    return y


if __name__ == "__main__":
    # Module hyperparameters (MonotonicNN(n, K, h_K)); `beta` and nn.Softmax are
    # unused in the PyTorch forward and therefore omitted here.
    n, K, h_K = 4, 3, 32
    b_z, b_t = 1.0, 1.0

    key = jax.random.PRNGKey(0)
    kx, kz, kt, kx2 = jax.random.split(key, 4)

    # Truncated-normal init approximating torch.nn.init.trunc_normal_.
    z = (jax.random.truncated_normal(kz, -2.0, 2.0, (K, h_K, n)) * b_z).astype(jnp.float32)
    t = (jax.random.truncated_normal(kt, -2.0, 2.0, (K, h_K)) * b_t).astype(jnp.float32)

    # 1) small batch (single padded tile).
    B1 = 8
    x1 = jax.random.normal(kx, (B1, n), dtype=jnp.float32)
    y1 = monotonic_nn_forward(x1, z, t)
    jax.block_until_ready(y1)
    assert y1.shape == (B1,)
    assert jnp.allclose(y1, reference_forward(x1, z, t), atol=1e-5, rtol=1e-5)

    # 2) batch exercising the grid + padding path (3 tiles of 128 lanes).
    B2 = 300
    x2 = jax.random.normal(kx2, (B2, n), dtype=jnp.float32)
    y2 = monotonic_nn_forward(x2, z, t, block_b=128)
    jax.block_until_ready(y2)
    assert y2.shape == (B2,)
    assert jnp.allclose(y2, reference_forward(x2, z, t), atol=1e-5, rtol=1e-5)

    print("KERNEL_OK")
</pallas_src>

<mosaic_0001>
module attributes {stable_mosaic.version = 11 : i64} {
  func.func @_monotonic_kernel(%arg0: i32, %arg1: memref<4x128xf32, #tpu.memory_space<vmem>>, %arg2: memref<96x4xf32, #tpu.memory_space<vmem>>, %arg3: memref<96x1xf32, #tpu.memory_space<vmem>>, %arg4: memref<1x128xf32, #tpu.memory_space<vmem>>) attributes {dimension_semantics = [#tpu.dimension_semantics<parallel>], iteration_bounds = array<i64: 1>, scalar_prefetch = 0 : i64, scratch_operands = 0 : i64, tpu.core_type = #tpu.core_type<tc>, window_params = [{transform_indices = @transform_0, window_bounds = array<i64: 4, 128>}, {pipeline_mode = #tpu.pipeline_mode<synchronous>, transform_indices = @transform_1, window_bounds = array<i64: 96, 4>}, {pipeline_mode = #tpu.pipeline_mode<synchronous>, transform_indices = @transform_2, window_bounds = array<i64: 96, 1>}, {transform_indices = @transform_3, window_bounds = array<i64: 1, 128>}]} {
    %c0 = arith.constant 0 : index
    %c0_0 = arith.constant 0 : index
    %0 = vector.load %arg2[%c0, %c0_0] : memref<96x4xf32, #tpu.memory_space<vmem>>, vector<96x4xf32>
    %c0_1 = arith.constant 0 : index
    %c0_2 = arith.constant 0 : index
    %1 = vector.load %arg1[%c0_1, %c0_2] : memref<4x128xf32, #tpu.memory_space<vmem>>, vector<4x128xf32>
    %cst = arith.constant dense<0.000000e+00> : vector<96x128xf32>
    %2 = tpu.matmul %0, %1, %cst {dimension_numbers = #tpu.dot_dimension_numbers<[1], [0], [0], [1], [0, 0, 1, 1], [], []>} : vector<96x4xf32>, vector<4x128xf32>, vector<96x128xf32> -> vector<96x128xf32>
    %c0_3 = arith.constant 0 : index
    %c0_4 = arith.constant 0 : index
    %3 = vector.load %arg3[%c0_3, %c0_4] : memref<96x1xf32, #tpu.memory_space<vmem>>, vector<96x1xf32>
    %4 = vector.broadcast %3 : vector<96x1xf32> to vector<96x128xf32>
    %5 = arith.addf %2, %4 : vector<96x128xf32>
    %6 = vector.extract_strided_slice %5 {offsets = [0, 0], sizes = [32, 128], strides = [1, 1]} : vector<96x128xf32> to vector<32x128xf32>
    %cst_5 = arith.constant dense<0xFF800000> : vector<128xf32>
    %7 = vector.multi_reduction <maximumf>, %6, %cst_5 [0] : vector<32x128xf32> to vector<128xf32>
    %8 = vector.shape_cast %7 : vector<128xf32> to vector<1x128xf32>
    %9 = vector.extract_strided_slice %5 {offsets = [32, 0], sizes = [32, 128], strides = [1, 1]} : vector<96x128xf32> to vector<32x128xf32>
    %cst_6 = arith.constant dense<0xFF800000> : vector<128xf32>
    %10 = vector.multi_reduction <maximumf>, %9, %cst_6 [0] : vector<32x128xf32> to vector<128xf32>
    %11 = vector.shape_cast %10 : vector<128xf32> to vector<1x128xf32>
    %12 = arith.minimumf %8, %11 : vector<1x128xf32>
    %13 = vector.extract_strided_slice %5 {offsets = [64, 0], sizes = [32, 128], strides = [1, 1]} : vector<96x128xf32> to vector<32x128xf32>
    %cst_7 = arith.constant dense<0xFF800000> : vector<128xf32>
    %14 = vector.multi_reduction <maximumf>, %13, %cst_7 [0] : vector<32x128xf32> to vector<128xf32>
    %15 = vector.shape_cast %14 : vector<128xf32> to vector<1x128xf32>
    %16 = arith.minimumf %12, %15 : vector<1x128xf32>
    %c0_8 = arith.constant 0 : index
    %c0_9 = arith.constant 0 : index
    %17 = vector.load %arg4[%c0_8, %c0_9] : memref<1x128xf32, #tpu.memory_space<vmem>>, vector<1x128xf32>
    tpu.vector_store %arg4[%c0_8, %c0_9], %16 {strides = array<i32>} : memref<1x128xf32, #tpu.memory_space<vmem>>, vector<1x128xf32>,
    return
  }
  func.func @transform_0(%arg0: i32) -> (i32, i32) {
    %c0_i32 = arith.constant 0 : i32
    %c0_i32_0 = arith.constant 0 : i32
    return %c0_i32, %arg0 : i32, i32
  }
  func.func @transform_1(%arg0: i32) -> (i32, i32) {
    %c0_i32 = arith.constant 0 : i32
    %c0_i32_0 = arith.constant 0 : i32
    %c0_i32_1 = arith.constant 0 : i32
    return %c0_i32, %c0_i32_0 : i32, i32
  }
  func.func @transform_2(%arg0: i32) -> (i32, i32) {
    %c0_i32 = arith.constant 0 : i32
    %c0_i32_0 = arith.constant 0 : i32
    %c0_i32_1 = arith.constant 0 : i32
    return %c0_i32, %c0_i32_0 : i32, i32
  }
  func.func @transform_3(%arg0: i32) -> (i32, i32) {
    %c0_i32 = arith.constant 0 : i32
    %c0_i32_0 = arith.constant 0 : i32
    return %c0_i32, %arg0 : i32, i32
  }
}

</mosaic_0001>

<llo_original>
// kernel: tpu_custom_call.1
$region0: #{tpu_custom_call.1}
  #allocation0 [shape = 'u32[]', space=smem, size = 0x4, offset = 0x4, fixed_abs, tag = 'smem constant byte address 0x4 - core index']
  #allocation1 [shape = 'u32[72,128]{1,0:T(1,128)}', space=vmem, size = 0x9000, scoped, tag = 'internal scratch']
  %s0 = inlined_call_operand.vmem [shape: f32[4,128], index: 0, kind: input, shape index: {}]
  %s1 = inlined_call_operand.vmem [shape: f32[96,4], index: 1, kind: input, shape index: {}]
  %s2 = inlined_call_operand.vmem [shape: f32[96,1], index: 2, kind: input, shape index: {}]
  %s3 = inlined_call_operand.hbm [shape: f32[1,128], index: 3, kind: output, shape index: {}]
  %s4 = sld [smem:[#allocation0]]
  $region22: #{tpu_custom_call.1} parent=0
    _
  %s6 = ssub.s32 1, %s4
  %s7 = scalar_select 0, %s6, %s4
  $region1: #{tpu_custom_call.1} parent=0
    #allocation2 [shape = 'u8[512]{0}', space=vmem, size = 0x400, scoped, tag = 'output window, operand 0, single buffered']
    #allocation3 [shape = 's32[1]{0}', space=sflag, size = 0x4, scoped, tag = 'scoped memory for tpu_custom_call.1']
    %8 = vsyncpa [#allocation3], 0
    // Predicated region
    $region2: #{tpu_custom_call.1} parent=1 // pred_check
      _
    $region3: #{tpu_custom_call.1} parent=1 // pred_check_branch
      %10 = sbr.rel (0) target = $region5
    $region4: #{tpu_custom_call.1} parent=1 // pred_region
      _
    $region5: #{tpu_custom_call.1} parent=1 // pred_fallthru
      _
    // Predicated region
    $region6: #{tpu_custom_call.1} parent=1 // pred_check
      _
    $region7: #{tpu_custom_call.1} parent=1 // pred_check_branch
      %12 = sbr.rel (0) target = $region9
    $region8: #{tpu_custom_call.1} parent=1 // pred_region
      _
    $region9: #{tpu_custom_call.1} parent=1 // pred_fallthru
      _
    // Predicated region
    $region10: #{tpu_custom_call.1} parent=1 // pred_check
      _
    $region11: #{tpu_custom_call.1} parent=1 // pred_check_branch
      %14 = sbr.rel (0) target = $region13
    $region12: #{tpu_custom_call.1} parent=1 // pred_region
      _
    $region13: #{tpu_custom_call.1} parent=1 // pred_fallthru
      _
    %v15 = vld [vmem:[%s1] sm:$0xff]
    %v16 = vld [vmem:[%s1 + $0x8] sm:$0xff]
    %v17 = vld [vmem:[%s1 + $0x10] sm:$0xff]
    %v18 = vld [vmem:[%s1 + $0x18] sm:$0xff]
    %v19 = vld [vmem:[%s1 + $0x20] sm:$0xff]
    %v20 = vld [vmem:[%s1 + $0x28] sm:$0xff]
    %v21 = vld [vmem:[%s1 + $0x30] sm:$0xff]
    %v22 = vld [vmem:[%s1 + $0x38] sm:$0xff]
    %v23 = vld [vmem:[%s1 + $0x40] sm:$0xff]
    %v24 = vld [vmem:[%s1 + $0x48] sm:$0xff]
    %v25 = vld [vmem:[%s1 + $0x50] sm:$0xff]
    %v26 = vld [vmem:[%s1 + $0x58] sm:$0xff]
    %v27 = vld [vmem:[%s0] sm:$0xf]
    %v28 = vld [vmem:[%s2] sm:$0xff]
    %v29 = vld [vmem:[%s2 + $0x8] sm:$0xff]
    %v30 = vld [vmem:[%s2 + $0x10] sm:$0xff]
    %v31 = vld [vmem:[%s2 + $0x18] sm:$0xff]
    %v32 = vld [vmem:[%s2 + $0x20] sm:$0xff]
    %v33 = vld [vmem:[%s2 + $0x28] sm:$0xff]
    %v34 = vld [vmem:[%s2 + $0x30] sm:$0xff]
    %v35 = vld [vmem:[%s2 + $0x38] sm:$0xff]
    %v36 = vld [vmem:[%s2 + $0x40] sm:$0xff]
    %v37 = vld [vmem:[%s2 + $0x48] sm:$0xff]
    %v38 = vld [vmem:[%s2 + $0x50] sm:$0xff]
    %v39 = vld [vmem:[%s2 + $0x58] sm:$0xff]
    %41 = vset.pattern.permute.xlu0 0
    %42 = vperm.xlu0 %41, %v28
    %v43 = vpop.permute.xlu0 %42
    %46 = vset.pattern.permute.xlu0 0
    %47 = vperm.xlu0 %46, %v29
    %v48 = vpop.permute.xlu0 %47
    %51 = vset.pattern.permute.xlu0 0
    %52 = vperm.xlu0 %51, %v30
    %v53 = vpop.permute.xlu0 %52
    %56 = vset.pattern.permute.xlu0 0
    %57 = vperm.xlu0 %56, %v31
    %v58 = vpop.permute.xlu0 %57
    %61 = vset.pattern.permute.xlu0 0
    %62 = vperm.xlu0 %61, %v32
    %v63 = vpop.permute.xlu0 %62
    %66 = vset.pattern.permute.xlu0 0
    %67 = vperm.xlu0 %66, %v33
    %v68 = vpop.permute.xlu0 %67
    %71 = vset.pattern.permute.xlu0 0
    %72 = vperm.xlu0 %71, %v34
    %v73 = vpop.permute.xlu0 %72
    %76 = vset.pattern.permute.xlu0 0
    %77 = vperm.xlu0 %76, %v35
    %v78 = vpop.permute.xlu0 %77
    %81 = vset.pattern.permute.xlu0 0
    %82 = vperm.xlu0 %81, %v36
    %v83 = vpop.permute.xlu0 %82
    %86 = vset.pattern.permute.xlu0 0
    %87 = vperm.xlu0 %86, %v37
    %v88 = vpop.permute.xlu0 %87
    %91 = vset.pattern.permute.xlu0 0
    %92 = vperm.xlu0 %91, %v38
    %v93 = vpop.permute.xlu0 %92
    %96 = vset.pattern.permute.xlu0 0
    %97 = vperm.xlu0 %96, %v39
    %v98 = vpop.permute.xlu0 %97
    %vm100 = vcmask 31744
    %v102 = vsel %vm100, %v15, 0
    %v105 = vsel %vm100, %v16, 0
    %v108 = vsel %vm100, %v17, 0
    %v111 = vsel %vm100, %v18, 0
    %v114 = vsel %vm100, %v19, 0
    %v117 = vsel %vm100, %v20, 0
    %v120 = vsel %vm100, %v21, 0
    %v123 = vsel %vm100, %v22, 0
    %v126 = vsel %vm100, %v23, 0
    %v129 = vsel %vm100, %v24, 0
    %v132 = vsel %vm100, %v25, 0
    %v135 = vsel %vm100, %v26, 0
    %vm137 = vcmask 1043456
    %v139 = vsel %vm137, %v27, 0
    %141 = vmatpush.msra.mxu0 0.0
    %142 = vmatpush.msra.mxu0 0.0
    %143 = vmatpush.msra.mxu0 0.0
    %144 = vmatpush.msra.mxu0 0.0
    %145 = vmatpush.msra.mxu0 0.0
    %146 = vmatpush.msra.mxu0 0.0
    %147 = vmatpush.msra.mxu0 0.0
    %148 = vmatpush.msra.mxu0 0.0
    %149 = vmatpush.msra.mxu0 0.0
    %150 = vmatpush.msra.mxu0 0.0
    %151 = vmatpush.msra.mxu0 0.0
    %152 = vmatpush.msra.mxu0 0.0
    %153 = vmatpush.msra.mxu0 0.0
    %154 = vmatpush.msra.mxu0 0.0
    %155 = vmatpush.msra.mxu0 0.0
    %156 = vmatpush.msra.mxu0 %v139
    %157 = vmatmul.f32.gmra.mxu0 %v102
    %v158 = vpop.f32.mrf.mxu0
    %v159 = vadd.f32 %v43, %v158
    %160 = vmatmul.f32.gmra.mxu0 %v105
    %v161 = vpop.f32.mrf.mxu0
    %v162 = vadd.f32 %v48, %v161
    %163 = vmatmul.f32.gmra.mxu0 %v108
    %v164 = vpop.f32.mrf.mxu0
    %v165 = vadd.f32 %v53, %v164
    %166 = vmatmul.f32.gmra.mxu0 %v111
    %v167 = vpop.f32.mrf.mxu0
    %v168 = vadd.f32 %v58, %v167
    %169 = vmatmul.f32.gmra.mxu0 %v114
    %v170 = vpop.f32.mrf.mxu0
    %v171 = vadd.f32 %v63, %v170
    %172 = vmatmul.f32.gmra.mxu0 %v117
    %v173 = vpop.f32.mrf.mxu0
    %v174 = vadd.f32 %v68, %v173
    %175 = vmatmul.f32.gmra.mxu0 %v120
    %v176 = vpop.f32.mrf.mxu0
    %v177 = vadd.f32 %v73, %v176
    %178 = vmatmul.f32.gmra.mxu0 %v123
    %v179 = vpop.f32.mrf.mxu0
    %v180 = vadd.f32 %v78, %v179
    %181 = vmatmul.f32.gmra.mxu0 %v126
    %v182 = vpop.f32.mrf.mxu0
    %v183 = vadd.f32 %v83, %v182
    %184 = vmatmul.f32.gmra.mxu0 %v129
    %v185 = vpop.f32.mrf.mxu0
    %v186 = vadd.f32 %v88, %v185
    %187 = vmatmul.f32.gmra.mxu0 %v132
    %v188 = vpop.f32.mrf.mxu0
    %v189 = vadd.f32 %v93, %v188
    %190 = vmatmul.f32.gmra.mxu0 %v135
    %v191 = vpop.f32.mrf.mxu0
    %v192 = vadd.f32 %v98, %v191
    %193 = vdwg.mxu0
    %v194 = vmax.f32 %v159, %v162
    %v195 = vmax.f32 %v165, %v168
    %v196 = vmax.f32 %v194, %v195
    %v197 = vrot.slane %v196, 4
    %v198 = vmax.f32 %v196, %v197
    %v199 = vrot.slane %v198, 2
    %v200 = vmax.f32 %v198, %v199
    %v201 = vrot.slane %v200, 1
    %v202 = vmax.f32 %v200, %v201
    %v203 = vmax.f32 %v171, %v174
    %v204 = vmax.f32 %v177, %v180
    %v205 = vmax.f32 %v203, %v204
    %v206 = vrot.slane %v205, 4
    %v207 = vmax.f32 %v205, %v206
    %v208 = vrot.slane %v207, 2
    %v209 = vmax.f32 %v207, %v208
    %v210 = vrot.slane %v209, 1
    %v211 = vmax.f32 %v209, %v210
    %v212 = vmin.f32 %v202, %v211
    %v213 = vmax.f32 %v183, %v186
    %v214 = vmax.f32 %v189, %v192
    %v215 = vmax.f32 %v213, %v214
    %v216 = vrot.slane %v215, 4
    %v217 = vmax.f32 %v215, %v216
    %v218 = vrot.slane %v217, 2
    %v219 = vmax.f32 %v217, %v218
    %v220 = vrot.slane %v219, 1
    %v221 = vmax.f32 %v219, %v220
    %v222 = vmin.f32 %v212, %v221
    %223 = vst [vmem:[#allocation2] sm:$0x1] %v222
    // Predicated region
    $region14: #{tpu_custom_call.1} parent=1 // pred_check
      _
    $region15: #{tpu_custom_call.1} parent=1 // pred_check_branch
      %225 = sbr.rel (0) target = $region17
    $region16: #{tpu_custom_call.1} parent=1 // pred_region
      %227 = vsyncadd [#allocation3], 0
      %s229 = sshll.u32 [#allocation2], 4
      %s230 = int_to_ptr.vmem [resolvable:$true] %s229
      %s231 = sshll.u32 %s3, 4
      %s232 = int_to_ptr.hbm [resolvable:$true] %s231
      %234 = dma.vmem_to_hbm [thread:$0]  %s230, 16, %s232, [#allocation3]
    $region17: #{tpu_custom_call.1} parent=1 // pred_fallthru
      _
    // Predicated region
    $region18: #{tpu_custom_call.1} parent=1 // pred_check
      _
    $region19: #{tpu_custom_call.1} parent=1 // pred_check_branch
      %236 = sbr.rel (0) target = $region21
    $region20: #{tpu_custom_call.1} parent=1 // pred_region
      %238 = dma.done [#allocation3], 16
    $region21: #{tpu_custom_call.1} parent=1 // pred_fallthru
      _
    %239 = vsyncpa [#allocation3], 1

</llo_original>
